<compile_context>
chip_gen: v7x
topology: tpu7x:2x2x1
jax: 0.10.0
libtpu: 0.0.40
codegen_flags: <defaults>
</compile_context>

<pallas_src>
import jax
import jax.numpy as jnp
from jax.experimental import pallas as pl
from jax.experimental.pallas import tpu as pltpu


# ---------------------------------------------------------------------------
# Fused kernels: [deconv(k2,s2) + concat + 1x1 conv + BN(eval) + ReLU]
# ---------------------------------------------------------------------------
def _up_kernel_interleaved(x_ref, x1_ref, wf_ref, wbd_ref, bias_ref, o_ref):
    """Generic path (any Cin/Cout). kw interleaved in the lane dim (2*C wide stores).

    x_ref   : (t, W, Cin)
    x1_ref  : (t, 2, W, 2*Cin)     [row, kh, w, kw*Cin + ci]
    wf_ref  : (2, Cin, 2*Cout)     folded deconv->1x1 weight, [kh, ci, kw*Cout + o]
    wbd_ref : (2*Cin, 2*Cout)      block-diagonal skip weight kron(I2, Wb^T)
    bias_ref: (1, 2*Cout)          folded BN bias (f32)
    o_ref   : (t, 2, W, 2*Cout)
    """
    t, w, cin = x_ref.shape
    two_cout = o_ref.shape[-1]
    xs = x_ref[...].reshape(t * w, cin)
    wbd = wbd_ref[...]
    bias = bias_ref[...]
    for kh in range(2):  # static unroll
        x1s = x1_ref[:, kh, :, :].reshape(t * w, 2 * cin)
        acc = jnp.dot(xs, wf_ref[kh, :, :], preferred_element_type=jnp.float32)
        acc += jnp.dot(x1s, wbd, preferred_element_type=jnp.float32)
        acc = jnp.maximum(acc + bias, 0.0)
        o_ref[:, kh, :, :] = acc.reshape(t, w, two_cout).astype(o_ref.dtype)


def _up_kernel_split(x_ref, x1_ref, wfq_ref, wbt_ref, bias_ref, o_ref):
    """128-aligned path (Cin % 128 == Cout % 128 == 0): zero-free skip GEMM.

    x_ref   : (t, W, Cin)
    x1_ref  : (t, 2, W, 2*Cin)     static lane-halves are the two kw columns
    wfq_ref : (4, Cin, Cout)       folded deconv->1x1 weight per (kh, kw)
    wbt_ref : (Cin, Cout)          skip weight Wb^T (no structural zeros)
    bias_ref: (1, Cout)
    o_ref   : (t, 2, W, 2*Cout)
    """
    t, w, cin = x_ref.shape
    cout = wbt_ref.shape[-1]
    xs = x_ref[...].reshape(t * w, cin)
    wbt = wbt_ref[...]
    bias = bias_ref[...]
    for kh in range(2):        # static unroll
        for kw in range(2):    # static unroll; all slices lane-aligned (multiples of 128)
            x1s = x1_ref[:, kh, :, kw * cin:(kw + 1) * cin].reshape(t * w, cin)
            acc = jnp.dot(xs, wfq_ref[2 * kh + kw, :, :],
                          preferred_element_type=jnp.float32)
            acc += jnp.dot(x1s, wbt, preferred_element_type=jnp.float32)
            acc = jnp.maximum(acc + bias, 0.0)
            o_ref[:, kh, :, kw * cout:(kw + 1) * cout] = (
                acc.reshape(t, w, cout).astype(o_ref.dtype))


# ---------------------------------------------------------------------------
# Weight folding (hoist this out of the hot path; call once per layer)
# ---------------------------------------------------------------------------
def fold_up_params(params, *, eps=1e-5, dtype=jnp.bfloat16):
    """Fold deconv + BN(eval) into the 1x1 conv.  Returns a dict of fused weights.

    TODO(synk): for very large Cin consider keeping the folded weights in f32 if the
    extra bf16 rounding step matters for the consumer.
    """
    w_up = params["w_up"].astype(jnp.float32)      # (Cin, Cup, 2, 2)  ConvTranspose2d
    w_conv = params["w_conv"].astype(jnp.float32)  # (Cout, 2*Cin, 1, 1)
    gamma = params["gamma"].astype(jnp.float32)
    beta = params["beta"].astype(jnp.float32)
    rmean = params["rmean"].astype(jnp.float32)
    rvar = params["rvar"].astype(jnp.float32)

    cin, cup = w_up.shape[0], w_up.shape[1]
    cout = w_conv.shape[0]
    scale = gamma * jax.lax.rsqrt(rvar + eps)      # (Cout,)
    bias = beta - rmean * scale                    # (Cout,)

    w1x1 = w_conv[:, :, 0, 0]                      # (Cout, 2*Cin)
    wa = w1x1[:, :cup] * scale[:, None]            # (Cout, Cup)  BN folded
    wb = w1x1[:, cup:] * scale[:, None]            # (Cout, Cin)  BN folded

    # Wf[kh, ci, kw, o] = sum_co w_up[ci, co, kh, kw] * wa[o, co]
    wf = jnp.einsum("icpq,oc->piqo", w_up, wa)     # (2, Cin, 2, Cout)

    split = (cin % 128 == 0) and (cout % 128 == 0)
    if split:
        wfq = wf.transpose(0, 2, 1, 3).reshape(4, cin, cout)     # [2*kh+kw, ci, o]
        return dict(split=True, cin=cin, cout=cout,
                    wf=wfq.astype(dtype),
                    wskip=wb.T.astype(dtype),                    # (Cin, Cout)
                    bias=bias.reshape(1, cout).astype(jnp.float32))
    # interleaved layout: lane index = kw*Cout + o / kw*Cin + ci
    wfull = wf.reshape(2, cin, 2 * cout)
    wbd = jnp.kron(jnp.eye(2, dtype=jnp.float32), wb.T)          # (2*Cin, 2*Cout)
    bias2 = jnp.tile(bias, 2).reshape(1, 2 * cout)
    return dict(split=False, cin=cin, cout=cout,
                wf=wfull.astype(dtype), wskip=wbd.astype(dtype),
                bias=bias2.astype(jnp.float32))


# ---------------------------------------------------------------------------
# Tile sizing from a VMEM bytes-per-row formula (works on v5e/v6e/v7x)
# ---------------------------------------------------------------------------
def _choose_rows_per_tile(nh, w, cin, cout, act_bytes, budget_bytes, user_cap=None):
    # Double-buffered pipelined bytes per nh-row (x + x1 + out) + f32 accum temporaries.
    per_row = 2 * act_bytes * w * (5 * cin + 4 * cout) + 16 * w * cout
    t = max(1, budget_bytes // per_row)
    if user_cap is not None:
        t = min(t, user_cap)
    if nh >= 2:
        t = min(t, (nh + 1) // 2)      # keep >= 2 row tiles so both v7x TCs get work
    return int(max(1, min(t, nh)))


# ---------------------------------------------------------------------------
# Forward (NHWC hot path)
# ---------------------------------------------------------------------------
def up_forward_nhwc(x, x1, folded, *, rows_per_tile=None,
                    vmem_budget_bytes=8 << 20, vmem_limit_bytes=32 << 20):
    """UP.forward, channels-last.  x: (N,H,W,Cin), x1: (N,2H,2W,Cin), folded from
    fold_up_params.  For best layout: W a multiple of 8, Cin/Cout multiples of 128."""
    N, H, W, Cin = x.shape
    assert Cin == folded["cin"], (Cin, folded["cin"])
    cout = folded["cout"]
    assert x1.shape == (N, 2 * H, 2 * W, Cin), (x.shape, x1.shape)

    act_dtype = x.dtype
    x1 = x1.astype(act_dtype)

    nh = N * H
    x3 = x.reshape(nh, W, Cin)                 # free reshape
    x1v = x1.reshape(nh, 2, W, 2 * Cin)        # free reshape: [nh, kh, w, kw*Cin + ci]

    t = _choose_rows_per_tile(nh, W, Cin, cout, jnp.dtype(act_dtype).itemsize,
                              vmem_budget_bytes, rows_per_tile)
    grid = (pl.cdiv(nh, t),)                   # partial last block: OOB writes masked

    kernel = _up_kernel_split if folded["split"] else _up_kernel_interleaved
    wf, wskip, bias = folded["wf"], folded["wskip"], folded["bias"]

    out = pl.pallas_call(
        kernel,
        out_shape=jax.ShapeDtypeStruct((nh, 2, W, 2 * cout), act_dtype),
        grid=grid,
        in_specs=[
            pl.BlockSpec((t, W, Cin), lambda i: (i, 0, 0)),            # x (read once)
            pl.BlockSpec((t, 2, W, 2 * Cin), lambda i: (i, 0, 0, 0)),  # x1 (contiguous)
            # Weights/bias: constant block index => DMA'd once, VMEM-resident.
            pl.BlockSpec(wf.shape, lambda i: (0,) * 3),
            pl.BlockSpec(wskip.shape, lambda i: (0, 0)),
            pl.BlockSpec(bias.shape, lambda i: (0, 0)),
        ],
        out_specs=pl.BlockSpec((t, 2, W, 2 * cout), lambda i: (i, 0, 0, 0)),
        compiler_params=pltpu.CompilerParams(
            dimension_semantics=("parallel",),          # megacore shards row tiles only
            vmem_limit_bytes=vmem_limit_bytes),         # explicit; safe on v5e..v7x
    )(x3, x1v, wf, wskip, bias)

    return out.reshape(N, 2 * H, 2 * W, cout)           # free reshape back to NHWC


def up_forward(x_nchw, x1_nchw, params, **kwargs):
    """PyTorch-layout (NCHW) convenience wrapper.
    TODO(synk): keep NHWC end-to-end in the surrounding model; these transposes are
    full extra HBM passes on a memory-bound op and should not be the hot path."""
    folded = fold_up_params(params, dtype=x_nchw.dtype)
    x = jnp.transpose(x_nchw, (0, 2, 3, 1))
    x1 = jnp.transpose(x1_nchw, (0, 2, 3, 1))
    out = up_forward_nhwc(x, x1, folded, **kwargs)
    return jnp.transpose(out, (0, 3, 1, 2))


# ---------------------------------------------------------------------------
# Pure-JAX reference + synthetic params
# ---------------------------------------------------------------------------
def up_reference_nhwc(x, x1, params, eps=1e-5):
    w_up = params["w_up"].astype(jnp.float32)       # (Cin, Cup, 2, 2)
    w_conv = params["w_conv"].astype(jnp.float32)   # (Cout, 2*Cin, 1, 1)
    xf = x.astype(jnp.float32)
    x1f = x1.astype(jnp.float32)
    N, H, W, _ = x.shape
    cup = w_up.shape[1]
    y = jnp.einsum("nhwc,copq->nhpwqo", xf, w_up).reshape(N, 2 * H, 2 * W, cup)
    z = jnp.concatenate([y, x1f], axis=-1)
    o = jnp.einsum("nhwc,oc->nhwo", z, w_conv[:, :, 0, 0])
    scale = params["gamma"] / jnp.sqrt(params["rvar"] + eps)
    o = o * scale + (params["beta"] - params["rmean"] * scale)
    return jnp.maximum(o, 0.0)


def make_params(key, in_channels, out_channels):
    """Synthetic params matching UP(in_channels, out_channels, kernel_size=2).
    TODO(synk): BatchNorm is folded in eval mode (running stats); training-mode batch
    statistics are not computed."""
    k = jax.random.split(key, 6)
    w_up = 0.1 * jax.random.normal(k[0], (in_channels, in_channels, 2, 2), jnp.float32)
    w_conv = 0.1 * jax.random.normal(k[1], (out_channels, 2 * in_channels, 1, 1), jnp.float32)
    gamma = 1.0 + 0.1 * jax.random.normal(k[2], (out_channels,), jnp.float32)
    beta = 0.1 * jax.random.normal(k[3], (out_channels,), jnp.float32)
    rmean = 0.05 * jax.random.normal(k[4], (out_channels,), jnp.float32)
    rvar = 1.0 + 0.1 * jnp.abs(jax.random.normal(k[5], (out_channels,), jnp.float32))
    return dict(w_up=w_up, w_conv=w_conv, gamma=gamma, beta=beta,
                rmean=rmean, rvar=rvar)


if __name__ == "__main__":
    key = jax.random.PRNGKey(0)
    kx, kx1, kp, kx2, kx12, kp2 = jax.random.split(key, 6)
    dtype = jnp.bfloat16                       # bf16 activations, f32 MXU accumulation

    def check(x, x1, params, tag):
        folded = fold_up_params(params, dtype=x.dtype)      # folded once per "layer"
        out = jax.block_until_ready(up_forward_nhwc(x, x1, folded))
        N, H, W, _ = x.shape
        cout = params["w_conv"].shape[0]
        assert out.shape == (N, 2 * H, 2 * W, cout), (tag, out.shape)
        assert out.dtype == x.dtype, (tag, out.dtype)
        assert bool(jnp.all(out >= 0.0)), tag               # ReLU output
        ref = up_reference_nhwc(x, x1, params)
        o32 = out.astype(jnp.float32)
        ok = bool(jnp.all(jnp.abs(o32 - ref) <= 0.08 + 0.05 * jnp.abs(ref)))
        assert ok, (tag, float(jnp.max(jnp.abs(o32 - ref))))

    # 1) Small / unaligned channels -> interleaved-lane kernel path.
    N, Cin, H, W, Cout = 2, 4, 8, 8, 8
    x = jax.random.normal(kx, (N, H, W, Cin), dtype)
    x1 = jax.random.normal(kx1, (N, 2 * H, 2 * W, Cin), dtype)
    p1 = make_params(kp, Cin, Cout)
    check(x, x1, p1, "interleave")

    # 2) 128-aligned channels -> split (zero-free skip GEMM) kernel path.
    N2, Cin2, H2, W2, Cout2 = 1, 128, 8, 8, 128
    xa = jax.random.normal(kx2, (N2, H2, W2, Cin2), dtype)
    x1a = jax.random.normal(kx12, (N2, 2 * H2, 2 * W2, Cin2), dtype)
    p2 = make_params(kp2, Cin2, Cout2)
    check(xa, x1a, p2, "split")

    # 3) NCHW convenience wrapper (shape check only; not the hot path).
    out_nchw = jax.block_until_ready(
        up_forward(jnp.transpose(x, (0, 3, 1, 2)), jnp.transpose(x1, (0, 3, 1, 2)), p1))
    assert out_nchw.shape == (N, Cout, 2 * H, 2 * W), out_nchw.shape

    print("KERNEL_OK")
</pallas_src>

<mosaic_0001>
module attributes {stable_mosaic.version = 11 : i64} {
  func.func @_up_kernel_interleaved(%arg0: i32, %arg1: memref<8x8x4xbf16, #tpu.memory_space<vmem>>, %arg2: memref<8x2x8x8xbf16, #tpu.memory_space<vmem>>, %arg3: memref<2x4x16xbf16, #tpu.memory_space<vmem>>, %arg4: memref<8x16xbf16, #tpu.memory_space<vmem>>, %arg5: memref<1x16xf32, #tpu.memory_space<vmem>>, %arg6: memref<8x2x8x16xbf16, #tpu.memory_space<vmem>>) attributes {dimension_semantics = [#tpu.dimension_semantics<parallel>], iteration_bounds = array<i64: 2>, scalar_prefetch = 0 : i64, scratch_operands = 0 : i64, tpu.core_type = #tpu.core_type<tc>, window_params = [{transform_indices = @transform_0, window_bounds = array<i64: 8, 8, 4>}, {transform_indices = @transform_1, window_bounds = array<i64: 8, 2, 8, 8>}, {pipeline_mode = #tpu.pipeline_mode<synchronous>, transform_indices = @transform_2, window_bounds = array<i64: 2, 4, 16>}, {pipeline_mode = #tpu.pipeline_mode<synchronous>, transform_indices = @transform_3, window_bounds = array<i64: 8, 16>}, {pipeline_mode = #tpu.pipeline_mode<synchronous>, transform_indices = @transform_4, window_bounds = array<i64: 1, 16>}, {transform_indices = @transform_5, window_bounds = array<i64: 8, 2, 8, 16>}]} {
    %c0 = arith.constant 0 : index
    %c0_0 = arith.constant 0 : index
    %c0_1 = arith.constant 0 : index
    %0 = vector.load %arg1[%c0, %c0_0, %c0_1] : memref<8x8x4xbf16, #tpu.memory_space<vmem>>, vector<8x8x4xbf16>
    %1 = vector.shape_cast %0 : vector<8x8x4xbf16> to vector<64x4xbf16>
    %c0_2 = arith.constant 0 : index
    %c0_3 = arith.constant 0 : index
    %2 = vector.load %arg4[%c0_2, %c0_3] : memref<8x16xbf16, #tpu.memory_space<vmem>>, vector<8x16xbf16>
    %c0_4 = arith.constant 0 : index
    %c0_5 = arith.constant 0 : index
    %3 = vector.load %arg5[%c0_4, %c0_5] : memref<1x16xf32, #tpu.memory_space<vmem>>, vector<1x16xf32>
    %c0_6 = arith.constant 0 : index
    %c0_7 = arith.constant 0 : index
    %c0_8 = arith.constant 0 : index
    %c0_9 = arith.constant 0 : index
    %4 = vector.load %arg2[%c0_6, %c0_7, %c0_8, %c0_9] : memref<8x2x8x8xbf16, #tpu.memory_space<vmem>>, vector<8x1x8x8xbf16>
    %5 = vector.shape_cast %4 : vector<8x1x8x8xbf16> to vector<8x8x8xbf16>
    %6 = vector.shape_cast %5 : vector<8x8x8xbf16> to vector<64x8xbf16>
    %c0_10 = arith.constant 0 : index
    %c0_11 = arith.constant 0 : index
    %c0_12 = arith.constant 0 : index
    %7 = vector.load %arg3[%c0_10, %c0_11, %c0_12] : memref<2x4x16xbf16, #tpu.memory_space<vmem>>, vector<1x4x16xbf16>
    %8 = vector.shape_cast %7 : vector<1x4x16xbf16> to vector<4x16xbf16>
    %cst = arith.constant dense<0.000000e+00> : vector<64x16xf32>
    %9 = tpu.matmul %1, %8, %cst {dimension_numbers = #tpu.dot_dimension_numbers<[1], [0], [0], [1], [0, 0, 1, 1], [], []>} : vector<64x4xbf16>, vector<4x16xbf16>, vector<64x16xf32> -> vector<64x16xf32>
    %cst_13 = arith.constant dense<0.000000e+00> : vector<64x16xf32>
    %10 = tpu.matmul %6, %2, %cst_13 {dimension_numbers = #tpu.dot_dimension_numbers<[1], [0], [0], [1], [0, 0, 1, 1], [], []>} : vector<64x8xbf16>, vector<8x16xbf16>, vector<64x16xf32> -> vector<64x16xf32>
    %11 = arith.addf %9, %10 : vector<64x16xf32>
    %12 = vector.broadcast %3 : vector<1x16xf32> to vector<64x16xf32>
    %13 = arith.addf %11, %12 : vector<64x16xf32>
    %cst_14 = arith.constant 0.000000e+00 : f32
    %14 = vector.broadcast %cst_14 : f32 to vector<64x16xf32>
    %15 = arith.maximumf %13, %14 : vector<64x16xf32>
    %16 = vector.shape_cast %15 : vector<64x16xf32> to vector<8x8x16xf32>
    %17 = arith.truncf %16 : vector<8x8x16xf32> to vector<8x8x16xbf16>
    %c0_15 = arith.constant 0 : index
    %c0_16 = arith.constant 0 : index
    %c0_17 = arith.constant 0 : index
    %c0_18 = arith.constant 0 : index
    %18 = vector.load %arg6[%c0_15, %c0_16, %c0_17, %c0_18] : memref<8x2x8x16xbf16, #tpu.memory_space<vmem>>, vector<8x1x8x16xbf16>
    %19 = vector.shape_cast %18 : vector<8x1x8x16xbf16> to vector<8x8x16xbf16>
    %20 = vector.shape_cast %17 : vector<8x8x16xbf16> to vector<8x1x8x16xbf16>
    tpu.vector_store %arg6[%c0_15, %c0_16, %c0_17, %c0_18], %20 {strides = array<i32>} : memref<8x2x8x16xbf16, #tpu.memory_space<vmem>>, vector<8x1x8x16xbf16>,
    %c0_19 = arith.constant 0 : index
    %c1 = arith.constant 1 : index
    %c0_20 = arith.constant 0 : index
    %c0_21 = arith.constant 0 : index
    %21 = vector.load %arg2[%c0_19, %c1, %c0_20, %c0_21] : memref<8x2x8x8xbf16, #tpu.memory_space<vmem>>, vector<8x1x8x8xbf16>
    %22 = vector.shape_cast %21 : vector<8x1x8x8xbf16> to vector<8x8x8xbf16>
    %23 = vector.shape_cast %22 : vector<8x8x8xbf16> to vector<64x8xbf16>
    %c1_22 = arith.constant 1 : index
    %c0_23 = arith.constant 0 : index
    %c0_24 = arith.constant 0 : index
    %24 = vector.load %arg3[%c1_22, %c0_23, %c0_24] : memref<2x4x16xbf16, #tpu.memory_space<vmem>>, vector<1x4x16xbf16>
    %25 = vector.shape_cast %24 : vector<1x4x16xbf16> to vector<4x16xbf16>
    %cst_25 = arith.constant dense<0.000000e+00> : vector<64x16xf32>
    %26 = tpu.matmul %1, %25, %cst_25 {dimension_numbers = #tpu.dot_dimension_numbers<[1], [0], [0], [1], [0, 0, 1, 1], [], []>} : vector<64x4xbf16>, vector<4x16xbf16>, vector<64x16xf32> -> vector<64x16xf32>
    %cst_26 = arith.constant dense<0.000000e+00> : vector<64x16xf32>
    %27 = tpu.matmul %23, %2, %cst_26 {dimension_numbers = #tpu.dot_dimension_numbers<[1], [0], [0], [1], [0, 0, 1, 1], [], []>} : vector<64x8xbf16>, vector<8x16xbf16>, vector<64x16xf32> -> vector<64x16xf32>
    %28 = arith.addf %26, %27 : vector<64x16xf32>
    %29 = vector.broadcast %3 : vector<1x16xf32> to vector<64x16xf32>
    %30 = arith.addf %28, %29 : vector<64x16xf32>
    %cst_27 = arith.constant 0.000000e+00 : f32
    %31 = vector.broadcast %cst_27 : f32 to vector<64x16xf32>
    %32 = arith.maximumf %30, %31 : vector<64x16xf32>
    %33 = vector.shape_cast %32 : vector<64x16xf32> to vector<8x8x16xf32>
    %34 = arith.truncf %33 : vector<8x8x16xf32> to vector<8x8x16xbf16>
    %c0_28 = arith.constant 0 : index
    %c1_29 = arith.constant 1 : index
    %c0_30 = arith.constant 0 : index
    %c0_31 = arith.constant 0 : index
    %35 = vector.load %arg6[%c0_28, %c1_29, %c0_30, %c0_31] : memref<8x2x8x16xbf16, #tpu.memory_space<vmem>>, vector<8x1x8x16xbf16>
    %36 = vector.shape_cast %35 : vector<8x1x8x16xbf16> to vector<8x8x16xbf16>
    %37 = vector.shape_cast %34 : vector<8x8x16xbf16> to vector<8x1x8x16xbf16>
    tpu.vector_store %arg6[%c0_28, %c1_29, %c0_30, %c0_31], %37 {strides = array<i32>} : memref<8x2x8x16xbf16, #tpu.memory_space<vmem>>, vector<8x1x8x16xbf16>,
    return
  }
  func.func @transform_0(%arg0: i32) -> (i32, i32, i32) {
    %c0_i32 = arith.constant 0 : i32
    %c0_i32_0 = arith.constant 0 : i32
    %c0_i32_1 = arith.constant 0 : i32
    return %arg0, %c0_i32, %c0_i32_0 : i32, i32, i32
  }
  func.func @transform_1(%arg0: i32) -> (i32, i32, i32, i32) {
    %c0_i32 = arith.constant 0 : i32
    %c0_i32_0 = arith.constant 0 : i32
    %c0_i32_1 = arith.constant 0 : i32
    %c0_i32_2 = arith.constant 0 : i32
    return %arg0, %c0_i32, %c0_i32_0, %c0_i32_1 : i32, i32, i32, i32
  }
  func.func @transform_2(%arg0: i32) -> (i32, i32, i32) {
    %c0_i32 = arith.constant 0 : i32
    %c0_i32_0 = arith.constant 0 : i32
    %c0_i32_1 = arith.constant 0 : i32
    %c0_i32_2 = arith.constant 0 : i32
    return %c0_i32, %c0_i32_0, %c0_i32_1 : i32, i32, i32
  }
  func.func @transform_3(%arg0: i32) -> (i32, i32) {
    %c0_i32 = arith.constant 0 : i32
    %c0_i32_0 = arith.constant 0 : i32
    %c0_i32_1 = arith.constant 0 : i32
    return %c0_i32, %c0_i32_0 : i32, i32
  }
  func.func @transform_4(%arg0: i32) -> (i32, i32) {
    %c0_i32 = arith.constant 0 : i32
    %c0_i32_0 = arith.constant 0 : i32
    %c0_i32_1 = arith.constant 0 : i32
    return %c0_i32, %c0_i32_0 : i32, i32
  }
  func.func @transform_5(%arg0: i32) -> (i32, i32, i32, i32) {
    %c0_i32 = arith.constant 0 : i32
    %c0_i32_0 = arith.constant 0 : i32
    %c0_i32_1 = arith.constant 0 : i32
    %c0_i32_2 = arith.constant 0 : i32
    return %arg0, %c0_i32, %c0_i32_0, %c0_i32_1 : i32, i32, i32, i32
  }
}

</mosaic_0001>

<llo_original>
// kernel: tpu_custom_call.1
$region0: #{tpu_custom_call.1}
  #allocation0 [shape = 'u32[]', space=smem, size = 0x4, offset = 0x4, fixed_abs, tag = 'smem constant byte address 0x4 - core index']
  #allocation1 [shape = 'u32[144,128]{1,0:T(1,128)}', space=vmem, size = 0x12000, scoped, tag = 'internal scratch']
  %s0 = inlined_call_operand.vmem [shape: bf16[16,8,4], index: 0, kind: input, shape index: {}]
  %s1 = inlined_call_operand.vmem [shape: bf16[16,2,8,8], index: 1, kind: input, shape index: {}]
  %s2 = inlined_call_operand.vmem [shape: bf16[2,4,16], index: 2, kind: input, shape index: {}]
  %s3 = inlined_call_operand.vmem [shape: bf16[8,16], index: 3, kind: input, shape index: {}]
  %s4 = inlined_call_operand.vmem [shape: f32[1,16], index: 4, kind: input, shape index: {}]
  %s5 = inlined_call_operand.hbm [shape: bf16[16,2,8,16], index: 5, kind: output, shape index: {}]
  %s6 = sld [smem:[#allocation0]]
  $region53: #{tpu_custom_call.1} parent=0
    _
  %s8 = ssub.s32 1, %s6
  %s9 = scalar_select 0, %s8, %s6
  $region1: #{tpu_custom_call.1} parent=0
    #allocation2 [shape = 'u8[65536]{0}', space=vmem, size = 0x10000, scoped, tag = 'output window, operand 0']
    #allocation3 [shape = 's32[2]{0}', space=sflag, size = 0x8, scoped, tag = 'scoped memory for tpu_custom_call.1']
    %10 = vsyncpa [#allocation3], 0
    %s11 = scalar_lea.sflag [#allocation3], 1
    %12 = vsyncpa %s11, 0
    loop: start=0, step=1, limit=4
    $region2: #{tpu_custom_call.1} parent=1 // loop_pre_header
      _
    $region3: #{tpu_custom_call.1} parent=1 // loop_header
      %s14 = sphi 0, %s18
      %p15 = scmp.ge.s32.totalorder %s14, 4
      %s24 = sphi 0, %s26
      %s27 = sphi 0, %s24
      %s28 = sphi 0, %s27
      %s44 = sphi 0, %s28
      %s50 = sphi 0, %s52
      %s53 = sphi 0, %s50
      %s54 = sphi 0, %s53
      %s70 = sphi 0, %s54
      %s74 = sphi 0, %s74
      %s76 = sphi 0, %s74
      %s77 = sphi 0, %s76
      %s91 = sphi 0, %s77
      %s95 = sphi 0, %s95
      %s97 = sphi 0, %s95
      %s98 = sphi 0, %s97
      %s112 = sphi 0, %s98
      %s116 = sphi 0, %s116
      %s118 = sphi 0, %s116
      %s119 = sphi 0, %s118
      %s133 = sphi 0, %s119
      %s139 = sphi 0, %s141
      %s142 = sphi 0, %s139
      %s143 = sphi 0, %s142
      %s159 = sphi 0, %s143
    $region4: #{tpu_custom_call.1} parent=1 // loop_header_branch
      %17 = sbr.rel (%p15) target = $region8
    $region5: #{tpu_custom_call.1} parent=1 // loop_body
      %s19 = ssub.s32 %s14, 1
      %s20 = ssub.s32 %s14, 2
      %s21 = sadd.s32 %s14, 1
      %s22 = ssub.s32 %s14, %s21
      %p23 = scmp.eq.s32.totalorder %s22, 0
      %s25 = sadd.s32 %s24, 1
      %s26 = scalar_select %p23, %s24, %s25
      %p29 = pneg %p23
      %p30 = scmp.eq.s32.totalorder %s14, 1
      %p31 = por %p29, %p30
      %p32 = scmp.ne.s32.totalorder %s24, %s27
      %p33 = scmp.eq.s32.totalorder %s14, 0
      %p34 = por %p32, %p33
      %p35 = scmp.ne.s32.totalorder %s24, %s27
      %p36 = scmp.eq.s32.totalorder %s19, 1
      %p37 = por %p35, %p36
      %p38 = scmp.ne.s32.totalorder %s27, %s28
      %p39 = scmp.eq.s32.totalorder %s19, 0
      %p40 = por %p38, %p39
      %p41 = scmp.ne.s32.totalorder %s27, %s28
      %p42 = scmp.eq.s32.totalorder %s20, 1
      %p43 = por %p41, %p42
      %p45 = scmp.ne.s32.totalorder %s28, %s44
      %p46 = scmp.eq.s32.totalorder %s20, 0
      %p47 = por %p45, %p46
      %s48 = ssub.s32 %s14, %s21
      %p49 = scmp.eq.s32.totalorder %s48, 0
      %s51 = sadd.s32 %s50, 1
      %s52 = scalar_select %p49, %s50, %s51
      %p55 = pneg %p49
      %p56 = scmp.eq.s32.totalorder %s14, 1
      %p57 = por %p55, %p56
      %p58 = scmp.ne.s32.totalorder %s50, %s53
      %p59 = scmp.eq.s32.totalorder %s14, 0
      %p60 = por %p58, %p59
      %p61 = scmp.ne.s32.totalorder %s50, %s53
      %p62 = scmp.eq.s32.totalorder %s19, 1
      %p63 = por %p61, %p62
      %p64 = scmp.ne.s32.totalorder %s53, %s54
      %p65 = scmp.eq.s32.totalorder %s19, 0
      %p66 = por %p64, %p65
      %p67 = scmp.ne.s32.totalorder %s53, %s54
      %p68 = scmp.eq.s32.totalorder %s20, 1
      %p69 = por %p67, %p68
      %p71 = scmp.ne.s32.totalorder %s54, %s70
      %p72 = scmp.eq.s32.totalorder %s20, 0
      %p73 = por %p71, %p72
      %s75 = sadd.s32 %s74, 1
      %p78 = scmp.eq.s32.totalorder %s14, 1
      %p79 = scmp.ne.s32.totalorder %s74, %s76
      %p80 = scmp.eq.s32.totalorder %s14, 0
      %p81 = por %p79, %p80
      %p82 = scmp.ne.s32.totalorder %s74, %s76
      %p83 = scmp.eq.s32.totalorder %s19, 1
      %p84 = por %p82, %p83
      %p85 = scmp.ne.s32.totalorder %s76, %s77
      %p86 = scmp.eq.s32.totalorder %s19, 0
      %p87 = por %p85, %p86
      %p88 = scmp.ne.s32.totalorder %s76, %s77
      %p89 = scmp.eq.s32.totalorder %s20, 1
      %p90 = por %p88, %p89
      %p92 = scmp.ne.s32.totalorder %s77, %s91
      %p93 = scmp.eq.s32.totalorder %s20, 0
      %p94 = por %p92, %p93
      %s96 = sadd.s32 %s95, 1
      %p99 = scmp.eq.s32.totalorder %s14, 1
      %p100 = scmp.ne.s32.totalorder %s95, %s97
      %p101 = scmp.eq.s32.totalorder %s14, 0
      %p102 = por %p100, %p101
      %p103 = scmp.ne.s32.totalorder %s95, %s97
      %p104 = scmp.eq.s32.totalorder %s19, 1
      %p105 = por %p103, %p104
      %p106 = scmp.ne.s32.totalorder %s97, %s98
      %p107 = scmp.eq.s32.totalorder %s19, 0
      %p108 = por %p106, %p107
      %p109 = scmp.ne.s32.totalorder %s97, %s98
      %p110 = scmp.eq.s32.totalorder %s20, 1
      %p111 = por %p109, %p110
      %p113 = scmp.ne.s32.totalorder %s98, %s112
      %p114 = scmp.eq.s32.totalorder %s20, 0
      %p115 = por %p113, %p114
      %s117 = sadd.s32 %s116, 1
      %p120 = scmp.eq.s32.totalorder %s14, 1
      %p121 = scmp.ne.s32.totalorder %s116, %s118
      %p122 = scmp.eq.s32.totalorder %s14, 0
      %p123 = por %p121, %p122
      %p124 = scmp.ne.s32.totalorder %s116, %s118
      %p125 = scmp.eq.s32.totalorder %s19, 1
      %p126 = por %p124, %p125
      %p127 = scmp.ne.s32.totalorder %s118, %s119
      %p128 = scmp.eq.s32.totalorder %s19, 0
      %p129 = por %p127, %p128
      %p130 = scmp.ne.s32.totalorder %s118, %s119
      %p131 = scmp.eq.s32.totalorder %s20, 1
      %p132 = por %p130, %p131
      %p134 = scmp.ne.s32.totalorder %s119, %s133
      %p135 = scmp.eq.s32.totalorder %s20, 0
      %p136 = por %p134, %p135
      %s137 = ssub.s32 %s14, %s21
      %p138 = scmp.eq.s32.totalorder %s137, 0
      %s140 = sadd.s32 %s139, 1
      %s141 = scalar_select %p138, %s139, %s140
      %p144 = pneg %p138
      %p145 = scmp.eq.s32.totalorder %s14, 1
      %p146 = por %p144, %p145
      %p147 = scmp.ne.s32.totalorder %s139, %s142
      %p148 = scmp.eq.s32.totalorder %s14, 0
      %p149 = por %p147, %p148
      %p150 = scmp.ne.s32.totalorder %s139, %s142
      %p151 = scmp.eq.s32.totalorder %s19, 1
      %p152 = por %p150, %p151
      %p153 = scmp.ne.s32.totalorder %s142, %s143
      %p154 = scmp.eq.s32.totalorder %s19, 0
      %p155 = por %p153, %p154
      %p156 = scmp.ne.s32.totalorder %s142, %s143
      %p157 = scmp.eq.s32.totalorder %s20, 1
      %p158 = por %p156, %p157
      %p160 = scmp.ne.s32.totalorder %s143, %s159
      %p161 = scmp.eq.s32.totalorder %s20, 0
      %p162 = por %p160, %p161
      %p163 = scmp.le.s32.totalorder 1, %s14
      %p164 = scmp.lt.s32.totalorder %s14, 3
      %p165 = pnand %p163, %p164
      %p166 = pneg %p165
      // Predicated region
      $region9: #{tpu_custom_call.1} parent=5 // pred_check
        _
      $region10: #{tpu_custom_call.1} parent=5 // pred_check_branch
        %168 = sbr.rel (%p165) target = $region12
      $region11: #{tpu_custom_call.1} parent=5 // pred_region
        %s169 = ssub.s32 %s14, 1
        // Predicated region
        $region13: #{tpu_custom_call.1} parent=11 // pred_check
          %p170 = pneg %p87
        $region14: #{tpu_custom_call.1} parent=11 // pred_check_branch
          %172 = sbr.rel (%p170) target = $region16
        $region15: #{tpu_custom_call.1} parent=11 // pred_region
          _
        $region16: #{tpu_custom_call.1} parent=11 // pred_fallthru
          _
        // Predicated region
        $region17: #{tpu_custom_call.1} parent=11 // pred_check
          %p173 = pneg %p108
        $region18: #{tpu_custom_call.1} parent=11 // pred_check_branch
          %175 = sbr.rel (%p173) target = $region20
        $region19: #{tpu_custom_call.1} parent=11 // pred_region
          _
        $region20: #{tpu_custom_call.1} parent=11 // pred_fallthru
          _
        // Predicated region
        $region21: #{tpu_custom_call.1} parent=11 // pred_check
          %p176 = pneg %p129
        $region22: #{tpu_custom_call.1} parent=11 // pred_check_branch
          %178 = sbr.rel (%p176) target = $region24
        $region23: #{tpu_custom_call.1} parent=11 // pred_region
          _
        $region24: #{tpu_custom_call.1} parent=11 // pred_fallthru
          _
      $region12: #{tpu_custom_call.1} parent=5 // pred_fallthru
        _
      %p179 = scmp.lt.s32.totalorder %s14, 2
      // Predicated region
      $region25: #{tpu_custom_call.1} parent=5 // pred_check
        %p180 = pneg %p179
      $region26: #{tpu_custom_call.1} parent=5 // pred_check_branch
        %182 = sbr.rel (%p180) target = $region28
      $region27: #{tpu_custom_call.1} parent=5 // pred_region
        // Predicated region
        $region29: #{tpu_custom_call.1} parent=27 // pred_check
          %p183 = pneg %p34
        $region30: #{tpu_custom_call.1} parent=27 // pred_check_branch
          %185 = sbr.rel (%p183) target = $region32
        $region31: #{tpu_custom_call.1} parent=27 // pred_region
          %s186 = smul.u32 8, %s14
          %p187 = scmp.lt.s32.totalorder %s186, 15
          %s188 = scalar_select %p187, %s186, 15
          %s189 = smul.addr %s188, 4
          %s190 = scalar_lea.vmem %s0, %s189
          %s191 = smul.u32 8, %s14
        $region32: #{tpu_custom_call.1} parent=27 // pred_fallthru
          _
        // Predicated region
        $region33: #{tpu_custom_call.1} parent=27 // pred_check
          %p192 = pneg %p60
        $region34: #{tpu_custom_call.1} parent=27 // pred_check_branch
          %194 = sbr.rel (%p192) target = $region36
        $region35: #{tpu_custom_call.1} parent=27 // pred_region
          %s195 = smul.u32 8, %s14
          %p196 = scmp.lt.s32.totalorder %s195, 15
          %s197 = scalar_select %p196, %s195, 15
          %s198 = smul.addr %s197, 2
          %s199 = smul.addr %s198, 4
          %s200 = scalar_lea.vmem %s1, %s199
          %s201 = smul.u32 8, %s14
        $region36: #{tpu_custom_call.1} parent=27 // pred_fallthru
          _
      $region28: #{tpu_custom_call.1} parent=5 // pred_fallthru
        _
      %p202 = scmp.le.s32.totalorder 1, %s14
      %p203 = scmp.lt.s32.totalorder %s14, 3
      %p204 = pnand %p202, %p203
      %p205 = pneg %p204
      // Predicated region
      $region37: #{tpu_custom_call.1} parent=5 // pred_check
        _
      $region38: #{tpu_custom_call.1} parent=5 // pred_check_branch
        %207 = sbr.rel (%p204) target = $region40
      $region39: #{tpu_custom_call.1} parent=5 // pred_region
        %s208 = ssub.s32 %s14, 1
        %s209 = smul.u32 8, %s19
        %p210 = scmp.lt.s32.totalorder %s209, 15
        %s211 = scalar_select %p210, %s209, 15
        %s212 = smul.addr %s211, 4
        %s213 = scalar_lea.vmem %s0, %s212
        %p214 = pneg %p40
        %p215 = pneg %p37
        %s216 = smul.u32 8, %s19
        %p217 = scmp.lt.s32.totalorder %s216, 15
        %s218 = scalar_select %p217, %s216, 15
        %s219 = smul.addr %s218, 2
        %s220 = smul.addr %s219, 4
        %s221 = scalar_lea.vmem %s1, %s220
        %p222 = pneg %p66
        %p223 = pneg %p63
        %p224 = pneg %p87
        %p225 = pneg %p84
        %p226 = pneg %p108
        %p227 = pneg %p105
        %p228 = pneg %p129
        %p229 = pneg %p126
        %p230 = pneg %p155
        %p231 = pneg %p152
        %s232 = sand.u32 %s142, 1
        %s233 = scalar_lea.sflag [#allocation3], %s232
        %s234 = sand.u32 %s142, 1
        %s235 = smul.addr %s234, 64
        %s236 = scalar_lea.vmem [#allocation2], %s235
        %s237 = smul.u32 8, %s19
        %p238 = scmp.lt.s32.totalorder %s237, 15
        %s239 = scalar_select %p238, %s237, 15
        %s240 = smul.addr %s239, 4
        %s241 = scalar_lea.vmem %s0, %s240
        %s242 = smul.u32 8, %s19
        %s243 = smul.u32 8, %s19
        %p244 = scmp.lt.s32.totalorder %s243, 15
        %s245 = scalar_select %p244, %s243, 15
        %s246 = smul.addr %s245, 2
        %s247 = smul.addr %s246, 4
        %s248 = scalar_lea.vmem %s1, %s247
        %s249 = smul.u32 8, %s19
        %s250 = smul.u32 8, %s19
        %v252 = vld [vmem:[%s241] sm:$0xf]
        %v253 = vld [vmem:[%s241 + $0x4] sm:$0xf]
        %v254 = vld [vmem:[%s241 + $0x8] sm:$0xf]
        %v255 = vld [vmem:[%s241 + $0xc] sm:$0xf]
        %v256 = vld [vmem:[%s241 + $0x10] sm:$0xf]
        %v257 = vld [vmem:[%s241 + $0x14] sm:$0xf]
        %v258 = vld [vmem:[%s241 + $0x18] sm:$0xf]
        %v259 = vld [vmem:[%s241 + $0x1c] sm:$0xf]
        %v260 = vld [vmem:[%s3] sm:$0xf]
        %v261 = vld [vmem:[%s4] sm:$0x1]
        %v262 = vld [vmem:[%s248] sm:$0xf]
        %v263 = vld [vmem:[%s248 + $0x8] sm:$0xf]
        %v264 = vld [vmem:[%s248 + $0x10] sm:$0xf]
        %v265 = vld [vmem:[%s248 + $0x18] sm:$0xf]
        %v266 = vld [vmem:[%s248 + $0x20] sm:$0xf]
        %v267 = vld [vmem:[%s248 + $0x28] sm:$0xf]
        %v268 = vld [vmem:[%s248 + $0x30] sm:$0xf]
        %v269 = vld [vmem:[%s248 + $0x38] sm:$0xf]
        %v270 = vld [vmem:[%s2] sm:$0x3]
        %v279 = vunpack.c.l.b16 %v262
        %v280 = vunpack.c.l.b16 %v263
        %v281 = vunpack.c.l.b16 %v264
        %v282 = vunpack.c.l.b16 %v265
        %v283 = vunpack.c.l.b16 %v266
        %v284 = vunpack.c.l.b16 %v267
        %v285 = vunpack.c.l.b16 %v268
        %v286 = vunpack.c.l.b16 %v269
        %v287 = vpack.c.b16 %v280, %v279
        %v288 = vpack.c.b16 %v282, %v281
        %v289 = vpack.c.b16 %v284, %v283
        %v290 = vpack.c.b16 %v286, %v285
        %vm291 = vcmask 64512
        %v293 = vsel %vm291, %v287, 0
        %v296 = vsel %vm291, %v288, 0
        %v299 = vsel %vm291, %v289, 0
        %v302 = vsel %vm291, %v290, 0
        %vm304 = vcmask 1043456
        %v306 = vsel %vm304, %v260, 0
        %308 = vmatprep.subr.bf16.mxu0 0
        %309 = vmatpush1.bf16.msra.mxu0 %v306
        %310 = vmatprep.subr.bf16.mxu0 0
        %311 = vmatpush1.bf16.msra.mxu0 0
        %312 = vmatprep.subr.bf16.mxu0 0
        %313 = vmatpush1.bf16.msra.mxu0 0
        %314 = vmatprep.subr.bf16.mxu0 0
        %315 = vmatpush1.bf16.msra.mxu0 0
        %316 = vmatprep.subr.bf16.mxu0 0
        %317 = vmatpush1.bf16.msra.mxu0 0
        %318 = vmatprep.subr.bf16.mxu0 0
        %319 = vmatpush1.bf16.msra.mxu0 0
        %320 = vmatprep.subr.bf16.mxu0 0
        %321 = vmatpush1.bf16.msra.mxu0 0
        %322 = vmatprep.subr.bf16.mxu0 0
        %323 = vmatpush1.bf16.msra.mxu0 0
        %324 = vmatprep.subr.bf16.mxu0 0
        %325 = vmatpush1.bf16.msra.mxu0 0
        %326 = vmatprep.subr.bf16.mxu0 0
        %327 = vmatpush1.bf16.msra.mxu0 0
        %328 = vmatprep.subr.bf16.mxu0 0
        %329 = vmatpush1.bf16.msra.mxu0 0
        %330 = vmatprep.subr.bf16.mxu0 0
        %331 = vmatpush1.bf16.msra.mxu0 0
        %332 = vmatprep.subr.bf16.mxu0 0
        %333 = vmatpush1.bf16.msra.mxu0 0
        %334 = vmatprep.subr.bf16.mxu0 0
        %335 = vmatpush1.bf16.msra.mxu0 0
        %336 = vmatprep.subr.bf16.mxu0 0
        %337 = vmatpush1.bf16.msra.mxu0 0
        %338 = vmatprep.subr.bf16.mxu0 0
        %339 = vmatpush1.bf16.msra.mxu0 0
        %340 = vmatprep.mubr.bf16.mxu0 0
        %341 = vmatmul.mubr.bf16.gmra.mrb[0].mxu0 %v293
        %v342 = vpop.f32.mrb[0].mxu0
        %v343 = vadd.f32 0.0, %v342
        %v344 = vpop.f32.mrb[0].mxu0
        %v345 = vpop.f32.mrb[0].mxu0
        %v346 = vadd.f32 0.0, %v345
        %v347 = vpop.f32.mrb[0].mxu0
        %348 = vmatprep.mubr.bf16.mxu0 0
        %349 = vmatmul.mubr.bf16.gmra.mrb[0].mxu0 %v296
        %v350 = vpop.f32.mrb[0].mxu0
        %v351 = vadd.f32 0.0, %v350
        %v352 = vpop.f32.mrb[0].mxu0
        %v353 = vpop.f32.mrb[0].mxu0
        %v354 = vadd.f32 0.0, %v353
        %v355 = vpop.f32.mrb[0].mxu0
        %356 = vmatprep.mubr.bf16.mxu0 0
        %357 = vmatmul.mubr.bf16.gmra.mrb[0].mxu0 %v299
        %v358 = vpop.f32.mrb[0].mxu0
        %v359 = vadd.f32 0.0, %v358
        %v360 = vpop.f32.mrb[0].mxu0
        %v361 = vpop.f32.mrb[0].mxu0
        %v362 = vadd.f32 0.0, %v361
        %v363 = vpop.f32.mrb[0].mxu0
        %364 = vmatprep.mubr.bf16.mxu0 0
        %365 = vmatmul.mubr.bf16.gmra.mrb[0].mxu0 %v302
        %v366 = vpop.f32.mrb[0].mxu0
        %v367 = vadd.f32 0.0, %v366
        %v368 = vpop.f32.mrb[0].mxu0
        %v369 = vpop.f32.mrb[0].mxu0
        %v370 = vadd.f32 0.0, %v369
        %v371 = vpop.f32.mrb[0].mxu0
        %372 = vdwg.mxu0
        %v381 = vunpack.c.l.b16 %v252
        %v382 = vunpack.c.l.b16 %v253
        %v383 = vunpack.c.l.b16 %v254
        %v384 = vunpack.c.l.b16 %v255
        %v385 = vunpack.c.l.b16 %v256
        %v386 = vunpack.c.l.b16 %v257
        %v387 = vunpack.c.l.b16 %v258
        %v388 = vunpack.c.l.b16 %v259
        %v389 = vpack.c.b16 %v382, %v381
        %v390 = vpack.c.b16 %v384, %v383
        %v391 = vpack.c.b16 %v386, %v385
        %v392 = vpack.c.b16 %v388, %v387
        %vm393 = vcmask 31744
        %v395 = vsel %vm393, %v389, 0
        %v398 = vsel %vm393, %v390, 0
        %v401 = vsel %vm393, %v391, 0
        %v404 = vsel %vm393, %v392, 0
        %vm406 = vcmask 1041408
        %v408 = vsel %vm406, %v270, 0
        %410 = vmatprep.subr.bf16.mxu0 0
        %411 = vmatpush1.bf16.msra.mxu0 %v408
        %412 = vmatprep.subr.bf16.mxu0 0
        %413 = vmatpush1.bf16.msra.mxu0 0
        %414 = vmatprep.subr.bf16.mxu0 0
        %415 = vmatpush1.bf16.msra.mxu0 0
        %416 = vmatprep.subr.bf16.mxu0 0
        %417 = vmatpush1.bf16.msra.mxu0 0
        %418 = vmatprep.subr.bf16.mxu0 0
        %419 = vmatpush1.bf16.msra.mxu0 0
        %420 = vmatprep.subr.bf16.mxu0 0
        %421 = vmatpush1.bf16.msra.mxu0 0
        %422 = vmatprep.subr.bf16.mxu0 0
        %423 = vmatpush1.bf16.msra.mxu0 0
        %424 = vmatprep.subr.bf16.mxu0 0
        %425 = vmatpush1.bf16.msra.mxu0 0
        %426 = vmatprep.subr.bf16.mxu0 0
        %427 = vmatpush1.bf16.msra.mxu0 0
        %428 = vmatprep.subr.bf16.mxu0 0
        %429 = vmatpush1.bf16.msra.mxu0 0
        %430 = vmatprep.subr.bf16.mxu0 0
        %431 = vmatpush1.bf16.msra.mxu0 0
        %432 = vmatprep.subr.bf16.mxu0 0
        %433 = vmatpush1.bf16.msra.mxu0 0
        %434 = vmatprep.subr.bf16.mxu0 0
        %435 = vmatpush1.bf16.msra.mxu0 0
        %436 = vmatprep.subr.bf16.mxu0 0
        %437 = vmatpush1.bf16.msra.mxu0 0
        %438 = vmatprep.subr.bf16.mxu0 0
        %439 = vmatpush1.bf16.msra.mxu0 0
        %440 = vmatprep.subr.bf16.mxu0 0
        %441 = vmatpush1.bf16.msra.mxu0 0
        %442 = vmatprep.mubr.bf16.mxu0 0
        %443 = vmatmul.mubr.bf16.gmra.mrb[0].mxu0 %v395
        %v444 = vpop.f32.mrb[0].mxu0
        %v445 = vadd.f32 %v343, %v444
        %v446 = vpop.f32.mrb[0].mxu0
        %v447 = vpop.f32.mrb[0].mxu0
        %v448 = vadd.f32 %v346, %v447
        %v449 = vpop.f32.mrb[0].mxu0
        %450 = vmatprep.mubr.bf16.mxu0 0
        %451 = vmatmul.mubr.bf16.gmra.mrb[0].mxu0 %v398
        %v452 = vpop.f32.mrb[0].mxu0
        %v453 = vadd.f32 %v351, %v452
        %v454 = vpop.f32.mrb[0].mxu0
        %v455 = vpop.f32.mrb[0].mxu0
        %v456 = vadd.f32 %v354, %v455
        %v457 = vpop.f32.mrb[0].mxu0
        %458 = vmatprep.mubr.bf16.mxu0 0
        %459 = vmatmul.mubr.bf16.gmra.mrb[0].mxu0 %v401
        %v460 = vpop.f32.mrb[0].mxu0
        %v461 = vadd.f32 %v359, %v460
        %v462 = vpop.f32.mrb[0].mxu0
        %v463 = vpop.f32.mrb[0].mxu0
        %v464 = vadd.f32 %v362, %v463
        %v465 = vpop.f32.mrb[0].mxu0
        %466 = vmatprep.mubr.bf16.mxu0 0
        %467 = vmatmul.mubr.bf16.gmra.mrb[0].mxu0 %v404
        %v468 = vpop.f32.mrb[0].mxu0
        %v469 = vadd.f32 %v367, %v468
        %v470 = vpop.f32.mrb[0].mxu0
        %v471 = vpop.f32.mrb[0].mxu0
        %v472 = vadd.f32 %v370, %v471
        %v473 = vpop.f32.mrb[0].mxu0
        %474 = vdwg.mxu0
        %v476 = vlaneseq
        %v477 = vshrl.u32 %v476, 7
        %v478 = vsub.s32 0, %v477
        %v479 = vrot.slane %v261, %v478
        %v481 = vadd.f32 %v445, %v479
        %v482 = vadd.f32 %v448, %v479
        %v483 = vadd.f32 %v453, %v479
        %v484 = vadd.f32 %v456, %v479
        %v485 = vadd.f32 %v461, %v479
        %v486 = vadd.f32 %v464, %v479
        %v487 = vadd.f32 %v469, %v479
        %v488 = vadd.f32 %v472, %v479
        %v489 = vmax.f32 %v481, 0.0
        %v490 = vmax.f32 %v482, 0.0
        %v491 = vmax.f32 %v483, 0.0
        %v492 = vmax.f32 %v484, 0.0
        %v493 = vmax.f32 %v485, 0.0
        %v494 = vmax.f32 %v486, 0.0
        %v495 = vmax.f32 %v487, 0.0
        %v496 = vmax.f32 %v488, 0.0
        %v497 = vpack.c.bf16 %v489, %v489
        %v498 = vpack.c.bf16 %v490, %v490
        %v499 = vpack.c.bf16 %v491, %v491
        %v500 = vpack.c.bf16 %v492, %v492
        %v501 = vpack.c.bf16 %v493, %v493
        %v502 = vpack.c.bf16 %v494, %v494
        %v503 = vpack.c.bf16 %v495, %v495
        %v504 = vpack.c.bf16 %v496, %v496
        %vm505 = vcmask 125952
        %506 = vst.msk [vmem:[%s236] sm:$0xf] %vm505, %v497
        %507 = vst.msk [vmem:[%s236 + $0x8] sm:$0xf] %vm505, %v498
        %508 = vst.msk [vmem:[%s236 + $0x10] sm:$0xf] %vm505, %v499
        %509 = vst.msk [vmem:[%s236 + $0x18] sm:$0xf] %vm505, %v500
        %510 = vst.msk [vmem:[%s236 + $0x20] sm:$0xf] %vm505, %v501
        %511 = vst.msk [vmem:[%s236 + $0x28] sm:$0xf] %vm505, %v502
        %512 = vst.msk [vmem:[%s236 + $0x30] sm:$0xf] %vm505, %v503
        %513 = vst.msk [vmem:[%s236 + $0x38] sm:$0xf] %vm505, %v504
        %s514 = scalar_lea.vmem %s248, 4
        %v515 = vld [vmem:[%s514] sm:$0xf]
        %v516 = vld [vmem:[%s514 + $0x8] sm:$0xf]
        %v517 = vld [vmem:[%s514 + $0x10] sm:$0xf]
        %v518 = vld [vmem:[%s514 + $0x18] sm:$0xf]
        %v519 = vld [vmem:[%s514 + $0x20] sm:$0xf]
        %v520 = vld [vmem:[%s514 + $0x28] sm:$0xf]
        %v521 = vld [vmem:[%s514 + $0x30] sm:$0xf]
        %v522 = vld [vmem:[%s514 + $0x38] sm:$0xf]
        %s523 = scalar_lea.vmem %s2, 2
        %v524 = vld [vmem:[%s523] sm:$0x3]
        %v533 = vunpack.c.l.b16 %v515
        %v534 = vunpack.c.l.b16 %v516
        %v535 = vunpack.c.l.b16 %v517
        %v536 = vunpack.c.l.b16 %v518
        %v537 = vunpack.c.l.b16 %v519
        %v538 = vunpack.c.l.b16 %v520
        %v539 = vunpack.c.l.b16 %v521
        %v540 = vunpack.c.l.b16 %v522
        %v541 = vpack.c.b16 %v534, %v533
        %v542 = vpack.c.b16 %v536, %v535
        %v543 = vpack.c.b16 %v538, %v537
        %v544 = vpack.c.b16 %v540, %v539
        %v546 = vsel %vm291, %v541, 0
        %v549 = vsel %vm291, %v542, 0
        %v552 = vsel %vm291, %v543, 0
        %v555 = vsel %vm291, %v544, 0
        %557 = vmatprep.subr.bf16.mxu0 0
        %558 = vmatpush1.bf16.msra.mxu0 %v306
        %559 = vmatprep.subr.bf16.mxu0 0
        %560 = vmatpush1.bf16.msra.mxu0 0
        %561 = vmatprep.subr.bf16.mxu0 0
        %562 = vmatpush1.bf16.msra.mxu0 0
        %563 = vmatprep.subr.bf16.mxu0 0
        %564 = vmatpush1.bf16.msra.mxu0 0
        %565 = vmatprep.subr.bf16.mxu0 0
        %566 = vmatpush1.bf16.msra.mxu0 0
        %567 = vmatprep.subr.bf16.mxu0 0
        %568 = vmatpush1.bf16.msra.mxu0 0
        %569 = vmatprep.subr.bf16.mxu0 0
        %570 = vmatpush1.bf16.msra.mxu0 0
        %571 = vmatprep.subr.bf16.mxu0 0
        %572 = vmatpush1.bf16.msra.mxu0 0
        %573 = vmatprep.subr.bf16.mxu0 0
        %574 = vmatpush1.bf16.msra.mxu0 0
        %575 = vmatprep.subr.bf16.mxu0 0
        %576 = vmatpush1.bf16.msra.mxu0 0
        %577 = vmatprep.subr.bf16.mxu0 0
        %578 = vmatpush1.bf16.msra.mxu0 0
        %579 = vmatprep.subr.bf16.mxu0 0
        %580 = vmatpush1.bf16.msra.mxu0 0
        %581 = vmatprep.subr.bf16.mxu0 0
        %582 = vmatpush1.bf16.msra.mxu0 0
        %583 = vmatprep.subr.bf16.mxu0 0
        %584 = vmatpush1.bf16.msra.mxu0 0
        %585 = vmatprep.subr.bf16.mxu0 0
        %586 = vmatpush1.bf16.msra.mxu0 0
        %587 = vmatprep.subr.bf16.mxu0 0
        %588 = vmatpush1.bf16.msra.mxu0 0
        %589 = vmatprep.mubr.bf16.mxu0 0
        %590 = vmatmul.mubr.bf16.gmra.mrb[0].mxu0 %v546
        %v591 = vpop.f32.mrb[0].mxu0
        %v592 = vadd.f32 0.0, %v591
        %v593 = vpop.f32.mrb[0].mxu0
        %v594 = vpop.f32.mrb[0].mxu0
        %v595 = vadd.f32 0.0, %v594
        %v596 = vpop.f32.mrb[0].mxu0
        %597 = vmatprep.mubr.bf16.mxu0 0
        %598 = vmatmul.mubr.bf16.gmra.mrb[0].mxu0 %v549
        %v599 = vpop.f32.mrb[0].mxu0
        %v600 = vadd.f32 0.0, %v599
        %v601 = vpop.f32.mrb[0].mxu0
        %v602 = vpop.f32.mrb[0].mxu0
        %v603 = vadd.f32 0.0, %v602
        %v604 = vpop.f32.mrb[0].mxu0
        %605 = vmatprep.mubr.bf16.mxu0 0
        %606 = vmatmul.mubr.bf16.gmra.mrb[0].mxu0 %v552
        %v607 = vpop.f32.mrb[0].mxu0
        %v608 = vadd.f32 0.0, %v607
        %v609 = vpop.f32.mrb[0].mxu0
        %v610 = vpop.f32.mrb[0].mxu0
        %v611 = vadd.f32 0.0, %v610
        %v612 = vpop.f32.mrb[0].mxu0
        %613 = vmatprep.mubr.bf16.mxu0 0
        %614 = vmatmul.mubr.bf16.gmra.mrb[0].mxu0 %v555
        %v615 = vpop.f32.mrb[0].mxu0
        %v616 = vadd.f32 0.0, %v615
        %v617 = vpop.f32.mrb[0].mxu0
        %v618 = vpop.f32.mrb[0].mxu0
        %v619 = vadd.f32 0.0, %v618
        %v620 = vpop.f32.mrb[0].mxu0
        %621 = vdwg.mxu0
        %v623 = vsel %vm406, %v524, 0
        %625 = vmatprep.subr.bf16.mxu0 0
        %626 = vmatpush1.bf16.msra.mxu0 %v623
        %627 = vmatprep.subr.bf16.mxu0 0
        %628 = vmatpush1.bf16.msra.mxu0 0
        %629 = vmatprep.subr.bf16.mxu0 0
        %630 = vmatpush1.bf16.msra.mxu0 0
        %631 = vmatprep.subr.bf16.mxu0 0
        %632 = vmatpush1.bf16.msra.mxu0 0
        %633 = vmatprep.subr.bf16.mxu0 0
        %634 = vmatpush1.bf16.msra.mxu0 0
        %635 = vmatprep.subr.bf16.mxu0 0
        %636 = vmatpush1.bf16.msra.mxu0 0
        %637 = vmatprep.subr.bf16.mxu0 0
        %638 = vmatpush1.bf16.msra.mxu0 0
        %639 = vmatprep.subr.bf16.mxu0 0
        %640 = vmatpush1.bf16.msra.mxu0 0
        %641 = vmatprep.subr.bf16.mxu0 0
        %642 = vmatpush1.bf16.msra.mxu0 0
        %643 = vmatprep.subr.bf16.mxu0 0
        %644 = vmatpush1.bf16.msra.mxu0 0
        %645 = vmatprep.subr.bf16.mxu0 0
        %646 = vmatpush1.bf16.msra.mxu0 0
        %647 = vmatprep.subr.bf16.mxu0 0
        %648 = vmatpush1.bf16.msra.mxu0 0
        %649 = vmatprep.subr.bf16.mxu0 0
        %650 = vmatpush1.bf16.msra.mxu0 0
        %651 = vmatprep.subr.bf16.mxu0 0
        %652 = vmatpush1.bf16.msra.mxu0 0
        %653 = vmatprep.subr.bf16.mxu0 0
        %654 = vmatpush1.bf16.msra.mxu0 0
        %655 = vmatprep.subr.bf16.mxu0 0
        %656 = vmatpush1.bf16.msra.mxu0 0
        %657 = vmatprep.mubr.bf16.mxu0 0
        %658 = vmatmul.mubr.bf16.gmra.mrb[0].mxu0 %v395
        %v659 = vpop.f32.mrb[0].mxu0
        %v660 = vadd.f32 %v592, %v659
        %v661 = vpop.f32.mrb[0].mxu0
        %v662 = vpop.f32.mrb[0].mxu0
        %v663 = vadd.f32 %v595, %v662
        %v664 = vpop.f32.mrb[0].mxu0
        %665 = vmatprep.mubr.bf16.mxu0 0
        %666 = vmatmul.mubr.bf16.gmra.mrb[0].mxu0 %v398
        %v667 = vpop.f32.mrb[0].mxu0
        %v668 = vadd.f32 %v600, %v667
        %v669 = vpop.f32.mrb[0].mxu0
        %v670 = vpop.f32.mrb[0].mxu0
        %v671 = vadd.f32 %v603, %v670
        %v672 = vpop.f32.mrb[0].mxu0
        %673 = vmatprep.mubr.bf16.mxu0 0
        %674 = vmatmul.mubr.bf16.gmra.mrb[0].mxu0 %v401
        %v675 = vpop.f32.mrb[0].mxu0
        %v676 = vadd.f32 %v608, %v675
        %v677 = vpop.f32.mrb[0].mxu0
        %v678 = vpop.f32.mrb[0].mxu0
        %v679 = vadd.f32 %v611, %v678
        %v680 = vpop.f32.mrb[0].mxu0
        %681 = vmatprep.mubr.bf16.mxu0 0
        %682 = vmatmul.mubr.bf16.gmra.mrb[0].mxu0 %v404
        %v683 = vpop.f32.mrb[0].mxu0
        %v684 = vadd.f32 %v616, %v683
        %v685 = vpop.f32.mrb[0].mxu0
        %v686 = vpop.f32.mrb[0].mxu0
        %v687 = vadd.f32 %v619, %v686
        %v688 = vpop.f32.mrb[0].mxu0
        %689 = vdwg.mxu0
        %v690 = vadd.f32 %v660, %v479
        %v691 = vadd.f32 %v663, %v479
        %v692 = vadd.f32 %v668, %v479
        %v693 = vadd.f32 %v671, %v479
        %v694 = vadd.f32 %v676, %v479
        %v695 = vadd.f32 %v679, %v479
        %v696 = vadd.f32 %v684, %v479
        %v697 = vadd.f32 %v687, %v479
        %v698 = vmax.f32 %v690, 0.0
        %v699 = vmax.f32 %v691, 0.0
        %v700 = vmax.f32 %v692, 0.0
        %v701 = vmax.f32 %v693, 0.0
        %v702 = vmax.f32 %v694, 0.0
        %v703 = vmax.f32 %v695, 0.0
        %v704 = vmax.f32 %v696, 0.0
        %v705 = vmax.f32 %v697, 0.0
        %v706 = vpack.c.bf16 %v698, %v698
        %v707 = vpack.c.bf16 %v699, %v699
        %v708 = vpack.c.bf16 %v700, %v700
        %v709 = vpack.c.bf16 %v701, %v701
        %v710 = vpack.c.bf16 %v702, %v702
        %v711 = vpack.c.bf16 %v703, %v703
        %v712 = vpack.c.bf16 %v704, %v704
        %v713 = vpack.c.bf16 %v705, %v705
        %s714 = scalar_lea.vmem %s236, 4 [#allocation2]
        %715 = vst.msk [vmem:[%s714] sm:$0xf] %vm505, %v706
        %716 = vst.msk [vmem:[%s714 + $0x8] sm:$0xf] %vm505, %v707
        %717 = vst.msk [vmem:[%s714 + $0x10] sm:$0xf] %vm505, %v708
        %718 = vst.msk [vmem:[%s714 + $0x18] sm:$0xf] %vm505, %v709
        %719 = vst.msk [vmem:[%s714 + $0x20] sm:$0xf] %vm505, %v710
        %720 = vst.msk [vmem:[%s714 + $0x28] sm:$0xf] %vm505, %v711
        %721 = vst.msk [vmem:[%s714 + $0x30] sm:$0xf] %vm505, %v712
        %722 = vst.msk [vmem:[%s714 + $0x38] sm:$0xf] %vm505, %v713
        %s723 = sand.u32 %s142, 1
        %s724 = scalar_lea.sflag [#allocation3], %s723
        %s725 = sand.u32 %s142, 1
        %s726 = smul.addr %s725, 64
        %s727 = scalar_lea.vmem [#allocation2], %s726
        // Predicated region
        $region41: #{tpu_custom_call.1} parent=39 // pred_check
          %p728 = pneg %p152
        $region42: #{tpu_custom_call.1} parent=39 // pred_check_branch
          %730 = sbr.rel (%p728) target = $region44
        $region43: #{tpu_custom_call.1} parent=39 // pred_region
          %s731 = smul.u32 8, %s19
          %s733 = ssub.s32 1024, 1024
          %734 = vsyncadd %s724, %s733
          %s735 = smul.addr %s731, 2
          %s736 = smul.addr %s735, 64
          %s737 = scalar_lea.hbm %s5, %s736
          %s738 = sshll.u32 %s727, 4
          %s739 = int_to_ptr.vmem [resolvable:$true] %s738
          %744 = dma.vmem_to_hbm [thread:$0]  %s739, 1024, %s737, %s724, 64, 64, 4
        $region44: #{tpu_custom_call.1} parent=39 // pred_fallthru
          _
      $region40: #{tpu_custom_call.1} parent=5 // pred_fallthru
        _
      %p745 = scmp.le.s32.totalorder 2, %s14
      // Predicated region
      $region45: #{tpu_custom_call.1} parent=5 // pred_check
        %p746 = pneg %p745
      $region46: #{tpu_custom_call.1} parent=5 // pred_check_branch
        %748 = sbr.rel (%p746) target = $region48
      $region47: #{tpu_custom_call.1} parent=5 // pred_region
        %s749 = ssub.s32 %s14, 2
        // Predicated region
        $region49: #{tpu_custom_call.1} parent=47 // pred_check
          %p750 = pneg %p158
        $region50: #{tpu_custom_call.1} parent=47 // pred_check_branch
          %752 = sbr.rel (%p750) target = $region52
        $region51: #{tpu_custom_call.1} parent=47 // pred_region
          %s753 = sand.u32 %s143, 1
          %s754 = scalar_lea.sflag [#allocation3], %s753
          %s755 = sand.u32 %s143, 1
          %s756 = smul.addr %s755, 64
          %s757 = scalar_lea.vmem [#allocation2], %s756
          %758 = dma.done %s754, 1024
        $region52: #{tpu_custom_call.1} parent=47 // pred_fallthru
          _
      $region48: #{tpu_custom_call.1} parent=5 // pred_fallthru
        _
    $region6: #{tpu_custom_call.1} parent=1 // loop_footer
      %s18 = sadd.s32 1, %s14
    $region7: #{tpu_custom_call.1} parent=1 // loop_footer_branch
      %13 = sbr.rel target = $region3
    $region8: #{tpu_custom_call.1} parent=1 // loop_exit
      _
    %759 = vsyncpa [#allocation3], 1
    %s760 = scalar_lea.sflag [#allocation3], 1
    %761 = vsyncpa %s760, 1

</llo_original>
